<compile_context>
chip_gen: v5e
topology: v5e:2x2
jax: 0.10.0
libtpu: 0.0.40
codegen_flags: <defaults>
</compile_context>

<pallas_src>
import functools

import jax
import jax.numpy as jnp
from jax.experimental import pallas as pl
from jax.experimental.pallas import tpu as pltpu


def _round_up(x, m):
    return ((x + m - 1) // m) * m


def _auto_config():
    """Per-TPU-generation defaults (num_parts, VMEM data budget, vmem limit)."""
    kind = ""
    try:
        kind = (jax.devices()[0].device_kind or "").lower()
    except Exception:
        pass
    if "v7" in kind or "7x" in kind:
        # 2 TensorCores per chip, 64 MiB VMEM per TC.
        return dict(num_parts=2,
                    vmem_budget_bytes=24 * 1024 * 1024,
                    vmem_limit_bytes=48 * 1024 * 1024)
    if "v6" in kind or "trillium" in kind or "v5e" in kind or "v5 lite" in kind:
        # Single TC, 128 MiB VMEM.
        return dict(num_parts=1,
                    vmem_budget_bytes=40 * 1024 * 1024,
                    vmem_limit_bytes=80 * 1024 * 1024)
    # Unknown chip: conservative settings that fit everywhere.
    return dict(num_parts=1,
                vmem_budget_bytes=24 * 1024 * 1024,
                vmem_limit_bytes=48 * 1024 * 1024)


def _contrastive_loss_kernel(result_ref, target_ref, out_ref, acc_ref, *,
                             margin, eps):
    """Processes one (TILE_B, D) batch tile and accumulates its loss sum.

    Grid = (NUM_PARTS, tiles_per_part); the inner axis is a reduction.  Each
    part keeps a lane-replicated (8, 128) f32 partial-sum accumulator in VMEM
    and writes its (1, 8, 128) output block only on the last inner step.
    """
    i = pl.program_id(1)

    @pl.when(i == 0)
    def _init():
        acc_ref[...] = jnp.zeros_like(acc_ref)

    # (-result)^2 == result^2.  Square in f32 (exact for f32 inputs; avoids
    # bf16 rounding for bf16 inputs and keeps the v5e VPU on f32).
    r = result_ref[...].astype(jnp.float32)                       # (TILE_B, D)
    sq = r * r

    # MXU row-sum: distances[row, lane] = sum_k sq[row, k] for every lane.
    d = sq.shape[1]
    ones_col = jnp.ones((d, 128), dtype=jnp.float32)
    dist = jnp.dot(sq, ones_col,
                   preferred_element_type=jnp.float32)            # (TILE_B, 128)

    t = target_ref[...].astype(jnp.float32)                       # (TILE_B, 1)
    hinge = jnp.maximum(margin - jnp.sqrt(dist + eps), 0.0)
    # 2x the torch per-row loss, replicated across the 128 lanes; the 0.5 and
    # the 1/128 lane replication are folded into the wrapper-side scaling.
    losses = t * dist + (1.0 - t) * (hinge * hinge)               # (TILE_B, 128)

    # Pure VPU vreg-add accumulation: (TILE_B,128) -> (TILE_B//8, 8, 128),
    # sum over axis 0 (no cross-lane reduce, no scalar sync in the hot loop).
    tile_b = losses.shape[0]
    acc_ref[...] += jnp.sum(losses.reshape(tile_b // 8, 8, 128), axis=0)

    @pl.when(i == pl.num_programs(1) - 1)
    def _finalize():
        out_ref[...] = acc_ref[...][None]                          # (1, 8, 128)


def contrastive_loss(result, target, *, margin=2.0, eps=1e-9, size_average=True,
                     num_parts=None, vmem_budget_bytes=None,
                     vmem_limit_bytes=None):
    """result: (B, D) float array, target: (B,) labels (0/1)."""
    B, D = result.shape
    itemsize = jnp.dtype(result.dtype).itemsize

    cfg = _auto_config()
    if num_parts is None:
        num_parts = cfg["num_parts"]
    if vmem_budget_bytes is None:
        vmem_budget_bytes = cfg["vmem_budget_bytes"]
    if vmem_limit_bytes is None:
        vmem_limit_bytes = cfg["vmem_limit_bytes"]

    # ---- TILE_B from the VMEM budget (multiple of 8) -------------------------
    # per-row bytes: 2x double-buffered input row + f32 squares row
    #                + ~3 lane-replicated f32 temporaries (dist/hinge/losses).
    per_row_bytes = 2 * D * itemsize + D * 4 + 3 * 128 * 4
    rows_cap = max(8, (vmem_budget_bytes // per_row_bytes) // 8 * 8)

    # Only split across parts (v7x's 2 TCs) when each part gets >=4 tiles.
    if num_parts > 1 and -(-B // rows_cap) < 4 * num_parts:
        num_parts = 1

    rows_per_part = -(-B // num_parts)                       # ceil
    tile_b = min(rows_cap, _round_up(rows_per_part, 8))
    tiles_per_part = -(-rows_per_part // tile_b)             # ceil
    padded_b = num_parts * tiles_per_part * tile_b

    # ---- pad tail rows: result rows -> 0, target -> 1  =>  loss contrib 0 ----
    target_col = target.astype(jnp.float32).reshape(B, 1)
    pad = padded_b - B
    if pad:
        result = jnp.pad(result, ((0, pad), (0, 0)))
        target_col = jnp.pad(target_col, ((0, pad), (0, 0)), constant_values=1.0)

    kernel = functools.partial(
        _contrastive_loss_kernel, margin=float(margin), eps=float(eps))

    cost = pl.CostEstimate(
        flops=int(padded_b * (3 * D + 2 * D * 128 + 6 * 128)),
        transcendentals=int(padded_b * 128),
        bytes_accessed=int(padded_b * D * itemsize + padded_b * 4
                           + num_parts * 8 * 128 * 4),
    )

    partials = pl.pallas_call(
        kernel,
        out_shape=jax.ShapeDtypeStruct((num_parts, 8, 128), jnp.float32),
        grid=(num_parts, tiles_per_part),
        in_specs=[
            pl.BlockSpec((tile_b, D),
                         lambda p, i, _n=tiles_per_part: (p * _n + i, 0)),
            pl.BlockSpec((tile_b, 1),
                         lambda p, i, _n=tiles_per_part: (p * _n + i, 0)),
        ],
        out_specs=pl.BlockSpec((1, 8, 128), lambda p, i: (p, 0, 0)),
        scratch_shapes=[pltpu.VMEM((8, 128), jnp.float32)],
        compiler_params=pltpu.CompilerParams(
            dimension_semantics=("parallel", "arbitrary"),
            vmem_limit_bytes=int(vmem_limit_bytes),
        ),
        cost_estimate=cost,
    )(result, target_col)

    # Kernel accumulates 2x the torch loss, replicated on 128 lanes.
    total = jnp.sum(partials) * (0.5 / 128.0)
    return total / B if size_average else total


def _reference(result, target, margin=2.0, eps=1e-9, size_average=True):
    # Plain-JAX reference mirroring the PyTorch forward exactly.
    t = target.astype(jnp.float32)
    distances = jnp.sum(jnp.square(-result), axis=1)
    hinge = jax.nn.relu(margin - jnp.sqrt(distances + eps))
    losses = 0.5 * (t * distances + (1.0 - t) * hinge ** 2)
    return losses.mean() if size_average else losses.sum()


if __name__ == "__main__":
    key = jax.random.PRNGKey(0)
    k1, k2, k3, k4 = jax.random.split(key, 4)

    # Primary small case (mean reduction).
    B, D = 8, 32
    result = jax.random.normal(k1, (B, D), dtype=jnp.float32)
    target = (jax.random.uniform(k2, (B,)) > 0.5).astype(jnp.int32)

    loss = jax.block_until_ready(contrastive_loss(result, target, margin=2.0))
    ref = _reference(result, target, margin=2.0)
    assert jnp.allclose(loss, ref, rtol=1e-5, atol=1e-5), (loss, ref)

    # Ragged batch (exercises zero-row / target-one padding) with sum reduction.
    B2, D2 = 13, 32
    result2 = jax.random.normal(k3, (B2, D2), dtype=jnp.float32)
    target2 = (jax.random.uniform(k4, (B2,)) > 0.5).astype(jnp.int32)

    loss2 = jax.block_until_ready(
        contrastive_loss(result2, target2, margin=2.0, size_average=False))
    ref2 = _reference(result2, target2, margin=2.0, size_average=False)
    assert jnp.allclose(loss2, ref2, rtol=1e-5, atol=1e-5), (loss2, ref2)

    print("KERNEL_OK")
</pallas_src>

<mosaic_0001>
module attributes {stable_mosaic.version = 11 : i64} {
  func.func @_contrastive_loss_kernel(%arg0: i32, %arg1: i32, %arg2: memref<8x32xf32, #tpu.memory_space<vmem>>, %arg3: memref<8x1xf32, #tpu.memory_space<vmem>>, %arg4: memref<1x8x128xf32, #tpu.memory_space<vmem>>, %arg5: memref<8x128xf32, #tpu.memory_space<vmem>>) attributes {dimension_semantics = [#tpu.dimension_semantics<parallel>, #tpu.dimension_semantics<arbitrary>], iteration_bounds = array<i64: 1, 1>, scalar_prefetch = 0 : i64, scratch_operands = 1 : i64, tpu.core_type = #tpu.core_type<tc>, window_params = [{transform_indices = @transform_0, window_bounds = array<i64: 8, 32>}, {transform_indices = @transform_1, window_bounds = array<i64: 8, 1>}, {transform_indices = @transform_2, window_bounds = array<i64: 1, 8, 128>}]} {
    %c0_i32 = arith.constant 0 : i32
    %0 = arith.cmpi eq, %arg1, %c0_i32 : i32
    %1 = arith.extui %0 : i1 to i32
    %c0_i32_0 = arith.constant 0 : i32
    %2 = arith.cmpi ne, %1, %c0_i32_0 : i32
    scf.if %2 {
      %cst_16 = arith.constant 0.000000e+00 : f32
      %31 = vector.broadcast %cst_16 : f32 to vector<8x128xf32>
      %c0_17 = arith.constant 0 : index
      %c0_18 = arith.constant 0 : index
      %32 = vector.load %arg5[%c0_17, %c0_18] : memref<8x128xf32, #tpu.memory_space<vmem>>, vector<8x128xf32>
      tpu.vector_store %arg5[%c0_17, %c0_18], %31 {strides = array<i32>} : memref<8x128xf32, #tpu.memory_space<vmem>>, vector<8x128xf32>,
    } else {
    }
    %c0 = arith.constant 0 : index
    %c0_1 = arith.constant 0 : index
    %3 = vector.load %arg2[%c0, %c0_1] : memref<8x32xf32, #tpu.memory_space<vmem>>, vector<8x32xf32>
    %4 = arith.mulf %3, %3 : vector<8x32xf32>
    %cst = arith.constant 1.000000e+00 : f32
    %5 = vector.broadcast %cst : f32 to vector<32x128xf32>
    %cst_2 = arith.constant dense<0.000000e+00> : vector<8x128xf32>
    %6 = tpu.matmul %4, %5, %cst_2 {dimension_numbers = #tpu.dot_dimension_numbers<[1], [0], [0], [1], [0, 0, 1, 1], [], []>} : vector<8x32xf32>, vector<32x128xf32>, vector<8x128xf32> -> vector<8x128xf32>
    %c0_3 = arith.constant 0 : index
    %c0_4 = arith.constant 0 : index
    %7 = vector.load %arg3[%c0_3, %c0_4] : memref<8x1xf32, #tpu.memory_space<vmem>>, vector<8x1xf32>
    %cst_5 = arith.constant 9.99999971E-10 : f32
    %8 = vector.broadcast %cst_5 : f32 to vector<8x128xf32>
    %9 = arith.addf %6, %8 : vector<8x128xf32>
    %10 = math.sqrt %9 : vector<8x128xf32>
    %cst_6 = arith.constant 2.000000e+00 : f32
    %11 = vector.broadcast %cst_6 : f32 to vector<8x128xf32>
    %12 = arith.subf %11, %10 : vector<8x128xf32>
    %cst_7 = arith.constant 0.000000e+00 : f32
    %13 = vector.broadcast %cst_7 : f32 to vector<8x128xf32>
    %14 = arith.maximumf %12, %13 : vector<8x128xf32>
    %15 = vector.broadcast %7 : vector<8x1xf32> to vector<8x128xf32>
    %16 = arith.mulf %15, %6 : vector<8x128xf32>
    %cst_8 = arith.constant 1.000000e+00 : f32
    %17 = vector.broadcast %cst_8 : f32 to vector<8x1xf32>
    %18 = arith.subf %17, %7 : vector<8x1xf32>
    %19 = arith.mulf %14, %14 : vector<8x128xf32>
    %20 = vector.broadcast %18 : vector<8x1xf32> to vector<8x128xf32>
    %21 = arith.mulf %20, %19 : vector<8x128xf32>
    %22 = arith.addf %16, %21 : vector<8x128xf32>
    %c0_9 = arith.constant 0 : index
    %c0_10 = arith.constant 0 : index
    %23 = vector.load %arg5[%c0_9, %c0_10] : memref<8x128xf32, #tpu.memory_space<vmem>>, vector<8x128xf32>
    %24 = vector.shape_cast %22 : vector<8x128xf32> to vector<1x8x128xf32>
    %cst_11 = arith.constant dense<0.000000e+00> : vector<8x128xf32>
    %25 = vector.multi_reduction <add>, %24, %cst_11 [0] : vector<1x8x128xf32> to vector<8x128xf32>
    %26 = arith.addf %23, %25 : vector<8x128xf32>
    %c0_12 = arith.constant 0 : index
    %c0_13 = arith.constant 0 : index
    %27 = vector.load %arg5[%c0_12, %c0_13] : memref<8x128xf32, #tpu.memory_space<vmem>>, vector<8x128xf32>
    tpu.vector_store %arg5[%c0_12, %c0_13], %26 {strides = array<i32>} : memref<8x128xf32, #tpu.memory_space<vmem>>, vector<8x128xf32>,
    %c0_i32_14 = arith.constant 0 : i32
    %28 = arith.cmpi eq, %arg1, %c0_i32_14 : i32
    %29 = arith.extui %28 : i1 to i32
    %c0_i32_15 = arith.constant 0 : i32
    %30 = arith.cmpi ne, %29, %c0_i32_15 : i32
    scf.if %30 {
      %c0_16 = arith.constant 0 : index
      %c0_17 = arith.constant 0 : index
      %31 = vector.load %arg5[%c0_16, %c0_17] : memref<8x128xf32, #tpu.memory_space<vmem>>, vector<8x128xf32>
      %32 = vector.shape_cast %31 : vector<8x128xf32> to vector<1x8x128xf32>
      %c0_18 = arith.constant 0 : index
      %c0_19 = arith.constant 0 : index
      %c0_20 = arith.constant 0 : index
      %33 = vector.load %arg4[%c0_18, %c0_19, %c0_20] : memref<1x8x128xf32, #tpu.memory_space<vmem>>, vector<1x8x128xf32>
      tpu.vector_store %arg4[%c0_18, %c0_19, %c0_20], %32 {strides = array<i32>} : memref<1x8x128xf32, #tpu.memory_space<vmem>>, vector<1x8x128xf32>,
    } else {
    }
    return
  }
  func.func @transform_0(%arg0: i32, %arg1: i32) -> (i32, i32) {
    %c1_i32 = arith.constant 1 : i32
    %0 = arith.muli %arg0, %c1_i32 : i32
    %1 = arith.addi %0, %arg1 : i32
    %c0_i32 = arith.constant 0 : i32
    %c0_i32_0 = arith.constant 0 : i32
    return %1, %c0_i32 : i32, i32
  }
  func.func @transform_1(%arg0: i32, %arg1: i32) -> (i32, i32) {
    %c1_i32 = arith.constant 1 : i32
    %0 = arith.muli %arg0, %c1_i32 : i32
    %1 = arith.addi %0, %arg1 : i32
    %c0_i32 = arith.constant 0 : i32
    %c0_i32_0 = arith.constant 0 : i32
    return %1, %c0_i32 : i32, i32
  }
  func.func @transform_2(%arg0: i32, %arg1: i32) -> (i32, i32, i32) {
    %c0_i32 = arith.constant 0 : i32
    %c0_i32_0 = arith.constant 0 : i32
    %c0_i32_1 = arith.constant 0 : i32
    return %arg0, %c0_i32, %c0_i32_0 : i32, i32, i32
  }
}

</mosaic_0001>

<llo_original>
// kernel: tpu_custom_call.1
$region0: #{tpu_custom_call.1}
  #allocation0 [shape = 'u32[]', space=smem, size = 0x4, offset = 0x4, fixed_abs, tag = 'smem constant byte address 0x4 - core index']
  #allocation1 [shape = 'u32[72,128]{1,0:T(1,128)}', space=vmem, size = 0x9000, scoped, tag = 'internal scratch']
  #allocation2 [shape = 'f32[8,128]{1,0:T(8,128)}', space=vmem, size = 0x1000, scoped, tag = 'scratch operand']
  %s0 = inlined_call_operand.vmem [shape: f32[8,32], index: 0, kind: input, shape index: {}]
  %s1 = inlined_call_operand.vmem [shape: f32[8,1], index: 1, kind: input, shape index: {}]
  %s2 = inlined_call_operand.hbm [shape: f32[1,8,128], index: 2, kind: output, shape index: {}]
  %s3 = sld [smem:[#allocation0]]
  $region26: #{tpu_custom_call.1} parent=0
    _
  %s5 = ssub.s32 1, %s3
  %s6 = scalar_select 0, %s5, %s3
  $region1: #{tpu_custom_call.1} parent=0
    #allocation3 [shape = 'u8[4096]{0}', space=vmem, size = 0x1000, scoped, tag = 'output window, operand 0, single buffered']
    #allocation4 [shape = 's32[1]{0}', space=sflag, size = 0x4, scoped, tag = 'scoped memory for tpu_custom_call.1']
    %7 = vsyncpa [#allocation4], 0
    // Predicated region
    $region2: #{tpu_custom_call.1} parent=1 // pred_check
      _
    $region3: #{tpu_custom_call.1} parent=1 // pred_check_branch
      %9 = sbr.rel (0) target = $region5
    $region4: #{tpu_custom_call.1} parent=1 // pred_region
      %s10 = sadd.s32 0, 0
      %p11 = scmp.lt.s32.totalorder %s10, 0
      %s12 = scalar_select %p11, %s10, 0
      %s13 = smul.addr %s12, 8
      %s14 = scalar_lea.vmem %s0, %s13
      %s15 = sadd.s32 0, 0
    $region5: #{tpu_custom_call.1} parent=1 // pred_fallthru
      _
    // Predicated region
    $region6: #{tpu_custom_call.1} parent=1 // pred_check
      _
    $region7: #{tpu_custom_call.1} parent=1 // pred_check_branch
      %17 = sbr.rel (0) target = $region9
    $region8: #{tpu_custom_call.1} parent=1 // pred_region
      %s18 = sadd.s32 0, 0
      %p19 = scmp.lt.s32.totalorder %s18, 0
      %s20 = scalar_select %p19, %s18, 0
      %s21 = smul.addr %s20, 8
      %s22 = scalar_lea.vmem %s1, %s21
      %s23 = sadd.s32 0, 0
    $region9: #{tpu_custom_call.1} parent=1 // pred_fallthru
      _
    %s24 = sadd.s32 0, 0
    %p25 = scmp.lt.s32.totalorder %s24, 0
    %s26 = scalar_select %p25, %s24, 0
    %s27 = smul.addr %s26, 8
    %s28 = scalar_lea.vmem %s0, %s27
    %s29 = sadd.s32 0, 0
    %p30 = scmp.lt.s32.totalorder %s29, 0
    %s31 = scalar_select %p30, %s29, 0
    %s32 = smul.addr %s31, 8
    %s33 = scalar_lea.vmem %s1, %s32
    %s34 = sadd.s32 0, 0
    %p35 = scmp.lt.s32.totalorder %s34, 0
    %s36 = scalar_select %p35, %s34, 0
    %s37 = smul.addr %s36, 8
    %s38 = scalar_lea.vmem %s0, %s37
    %s39 = sadd.s32 0, 0
    %s40 = sadd.s32 0, 0
    %p41 = scmp.lt.s32.totalorder %s40, 0
    %s42 = scalar_select %p41, %s40, 0
    %s43 = smul.addr %s42, 8
    %s44 = scalar_lea.vmem %s1, %s43
    %s45 = sadd.s32 0, 0
    %p46 = scmp.eq.s32.totalorder 0, 0
    // Predicated region
    $region10: #{tpu_custom_call.1} parent=1 // pred_check
      %p47 = pneg %p46
    $region11: #{tpu_custom_call.1} parent=1 // pred_check_branch
      %49 = sbr.rel (%p47) target = $region13
    $region12: #{tpu_custom_call.1} parent=1 // pred_region
      %50 = vst [vmem:[#allocation2] sm:$0xff] 0.0
    $region13: #{tpu_custom_call.1} parent=1 // pred_fallthru
      _
    %v51 = vld [vmem:[%s38] sm:$0xff]
    %v52 = vmul.f32 %v51, %v51
    %vm53 = vcmask 261120
    %v55 = vsel %vm53, %v52, 0
    %57 = vmatpush.msra.mxu0 0.0
    %58 = vmatpush.msra.mxu0 0.0
    %59 = vmatpush.msra.mxu0 0.0
    %60 = vmatpush.msra.mxu0 0.0
    %61 = vmatpush.msra.mxu0 0.0
    %62 = vmatpush.msra.mxu0 0.0
    %63 = vmatpush.msra.mxu0 0.0
    %64 = vmatpush.msra.mxu0 0.0
    %65 = vmatpush.msra.mxu0 0.0
    %66 = vmatpush.msra.mxu0 0.0
    %67 = vmatpush.msra.mxu0 0.0
    %68 = vmatpush.msra.mxu0 0.0
    %69 = vmatpush.msra.mxu0 1.0
    %70 = vmatpush.msra.mxu0 1.0
    %71 = vmatpush.msra.mxu0 1.0
    %72 = vmatpush.msra.mxu0 1.0
    %73 = vmatmul.f32.gmra.mxu0 %v55
    %v74 = vpop.f32.mrf.mxu0
    %v75 = vadd.f32 0.0, %v74
    %76 = vdwg.mxu0
    %v77 = vld [vmem:[%s44] sm:$0xff]
    %v78 = vadd.f32 %v75, 1e-09
    %v79 = vrsqrt.pop %v78
    %v80 = vmul.f32 %v79, %v78
    %v81 = vmul.f32 %v80, %v79
    %v82 = vmul.f32 0.5, %v81
    %v83 = vsub.f32 1.5, %v82
    %v84 = vmul.f32 %v79, %v83
    %v85 = vmul.f32 %v78, %v84
    %vm86 = vcmp.eq.f32.partialorder %v78, inf
    %v87 = vsel %vm86, %v78, %v85
    %vm88 = vcmp.eq.f32.partialorder %v78, 0.0
    %v89 = vand.u32 %v78, 2147483648
    %v90 = vsel %vm88, %v89, %v87
    %v91 = vsub.f32 2.0, %v90
    %v92 = vmax.f32 %v91, 0.0
    %94 = vset.pattern.permute.xlu0 0
    %95 = vperm.xlu0 %94, %v77
    %v96 = vpop.permute.xlu0 %95
    %v98 = vmul.f32 %v96, %v75
    %v99 = vsub.f32 1.0, %v77
    %v100 = vmul.f32 %v92, %v92
    %102 = vset.pattern.permute.xlu0 0
    %103 = vperm.xlu0 %102, %v99
    %v104 = vpop.permute.xlu0 %103
    %v106 = vmul.f32 %v104, %v100
    %v107 = vadd.f32 %v98, %v106
    %v108 = vld [vmem:[#allocation2] sm:$0xff]
    %v109 = vadd.f32 %v107, 0.0
    %v110 = vadd.f32 %v108, %v109
    %111 = vst [vmem:[#allocation2] sm:$0xff] %v110
    // Predicated region
    $region14: #{tpu_custom_call.1} parent=1 // pred_check
      %p112 = pneg %p46
    $region15: #{tpu_custom_call.1} parent=1 // pred_check_branch
      %114 = sbr.rel (%p112) target = $region17
    $region16: #{tpu_custom_call.1} parent=1 // pred_region
      %v115 = vld [vmem:[#allocation2] sm:$0xff]
      %116 = vst [vmem:[#allocation3] sm:$0xff] %v115
    $region17: #{tpu_custom_call.1} parent=1 // pred_fallthru
      _
    // Predicated region
    $region18: #{tpu_custom_call.1} parent=1 // pred_check
      _
    $region19: #{tpu_custom_call.1} parent=1 // pred_check_branch
      %118 = sbr.rel (0) target = $region21
    $region20: #{tpu_custom_call.1} parent=1 // pred_region
      %120 = vsyncadd [#allocation4], 0
      %s122 = sshll.u32 [#allocation3], 4
      %s123 = int_to_ptr.vmem [resolvable:$true] %s122
      %s124 = sshll.u32 %s2, 4
      %s125 = int_to_ptr.hbm [resolvable:$true] %s124
      %127 = dma.vmem_to_hbm [thread:$0]  %s123, 128, %s125, [#allocation4]
    $region21: #{tpu_custom_call.1} parent=1 // pred_fallthru
      _
    // Predicated region
    $region22: #{tpu_custom_call.1} parent=1 // pred_check
      _
    $region23: #{tpu_custom_call.1} parent=1 // pred_check_branch
      %129 = sbr.rel (0) target = $region25
    $region24: #{tpu_custom_call.1} parent=1 // pred_region
      %131 = dma.done [#allocation4], 128
    $region25: #{tpu_custom_call.1} parent=1 // pred_fallthru
      _
    %132 = vsyncpa [#allocation4], 1

</llo_original>
